<compile_context>
chip_gen: v7x
topology: tpu7x:2x2x1
jax: 0.10.0
libtpu: 0.0.40
codegen_flags: <defaults>
</compile_context>

<pallas_src>
import math
import numpy as np
import jax
import jax.numpy as jnp
from jax.experimental import pallas as pl
from jax.experimental.pallas import tpu as pltpu


def _cdiv(a, b):
    return -(-a // b)


def _round_up(a, b):
    return _cdiv(a, b) * b


def _bilinear_matrix(in_size: int, out_size: int, align_corners: bool) -> np.ndarray:
    """Row-stochastic (out_size, in_size) matrix reproducing torch bilinear sampling.

    Note: for non-integer scale factors with align_corners=False this uses the
    in/out size ratio (recompute_scale_factor=True semantics); identical to torch
    for DPT's integer scale_factor=2.
    """
    out_idx = np.arange(out_size, dtype=np.float64)
    if align_corners:
        if out_size == 1:
            src = np.zeros_like(out_idx)
        else:
            src = out_idx * (in_size - 1) / (out_size - 1)
    else:
        scale = in_size / out_size
        src = (out_idx + 0.5) * scale - 0.5
        src = np.clip(src, 0.0, in_size - 1)
    i0 = np.floor(src).astype(np.int64)
    i0 = np.clip(i0, 0, in_size - 1)
    i1 = np.minimum(i0 + 1, in_size - 1)
    frac = src - i0
    w = np.zeros((out_size, in_size), dtype=np.float32)
    np.add.at(w, (np.arange(out_size), i0), (1.0 - frac).astype(np.float32))
    np.add.at(w, (np.arange(out_size), i1), frac.astype(np.float32))
    return w


# --------------------------------------------------------------------------
# VMEM sizing / blocking (generation-aware).
# --------------------------------------------------------------------------
def _vmem_capacity_bytes() -> int:
    try:
        info = pltpu.get_tpu_info()
        cap = getattr(info, "vmem_capacity_bytes", None)
        if cap:
            return int(cap)
    except Exception:
        pass
    return 64 * 1024 * 1024  # conservative (v7x-sized) fallback


def _sublane_multiple(itemsize: int) -> int:
    # 32-bit -> 8 sublanes, 16-bit -> 16, 8-bit -> 32.
    return {4: 8, 2: 16, 1: 32}.get(int(itemsize), 8)


def _block_vmem_bytes(c_blk, w_blk, h_in, w_in, h_out, x_item, cmp_item):
    return (2 * c_blk * h_in * w_in * x_item           # double-buffered input block
            + 2 * c_blk * h_out * w_blk * x_item       # double-buffered output block
            + 2 * (h_out * h_in + w_in * w_blk) * cmp_item  # (double-buffered) weights
            + c_blk * h_in * w_blk * cmp_item)         # intermediate scratch


def _choose_blocking(num_planes, h_in, w_in, h_out, w_out, x_item, cmp_item, budget):
    """Returns (c_blk, grid_planes, planes_pad, w_blk, n_w, w_pad)."""
    s = _sublane_multiple(x_item)
    a = s // math.gcd(h_in, s)
    b = s // math.gcd(h_out, s)
    m = a * b // math.gcd(a, b)  # c_blk multiple of m => sublane-aligned blocks

    # ---- Path 1: full output width per step, c_blk planes per step.
    A = 2 * h_in * w_in * x_item + 2 * h_out * w_out * x_item + h_in * w_out * cmp_item
    B = 2 * (h_out * h_in + w_in * w_out) * cmp_item
    c_hi = _round_up(num_planes, m)
    c_fit = min((budget - B) // A, c_hi) if budget > B else 0
    c_fit = (c_fit // m) * m
    if c_fit >= m:
        g = _cdiv(num_planes, c_fit)
        if num_planes > 1:
            g = max(g, 2)            # >= 2 steps: pipelining + megacore sharding
        if g > 1 and g % 2:
            g += 1                   # even grid -> balanced split across 2 TCs (v7x)
        c_blk = min(_round_up(_cdiv(num_planes, g), m), c_fit)
        planes_pad = g * c_blk
        return c_blk, g, planes_pad, w_out, 1, w_out

    # ---- Path 2: minimum aligned plane group, tile the output width (lane-dense).
    c_blk = m
    grid_planes = _cdiv(num_planes, c_blk)
    planes_pad = grid_planes * c_blk
    A_w = 2 * c_blk * h_out * x_item + 2 * w_in * cmp_item + c_blk * h_in * cmp_item
    B_w = 2 * c_blk * h_in * w_in * x_item + 2 * h_out * h_in * cmp_item
    w_fit = (budget - B_w) // A_w if budget > B_w else 0
    w_blk = max(128, min(w_fit, _round_up(w_out, 128)) // 128 * 128)
    w_pad = _round_up(w_out, w_blk)
    return c_blk, grid_planes, planes_pad, w_blk, w_pad // w_blk, w_pad


# --------------------------------------------------------------------------
# Kernel. One grid step handles C_BLK planes x one W_out column block.
#   wh_ref : (H_out, H_in)            shared, resident (constant index_map)
#   x_ref  : (C_BLK*H_in, W_in)       flattened plane block (no in-kernel reshape)
#   wwt_ref: (W_in, W_BLK)            W_w^T column block (resident when n_w == 1)
#   o_ref  : (C_BLK*H_out, W_BLK)
#   tmp_ref: (C_BLK*H_in, W_BLK)      explicit VMEM scratch for the intermediate
# --------------------------------------------------------------------------
def _interp_kernel(wh_ref, x_ref, wwt_ref, o_ref, tmp_ref):
    h_out, h_in = wh_ref.shape
    c_blk = x_ref.shape[0] // h_in

    # Width pass: one big flattened matmul (M = C_BLK*H_in) fills the MXU.
    tmp_ref[...] = jnp.dot(
        x_ref[...], wwt_ref[...], preferred_element_type=jnp.float32
    ).astype(tmp_ref.dtype)

    wh = wh_ref[...]  # hoisted once; weight block stays resident across the grid.

    def plane(r_in, r_out):
        t = tmp_ref[pl.ds(r_in, h_in), :]
        o_ref[pl.ds(r_out, h_out), :] = jnp.dot(
            wh, t, preferred_element_type=jnp.float32
        ).astype(o_ref.dtype)

    if c_blk <= 8:
        # Static unroll: every matmul push / tmp load / output store is visible
        # to the LLO scheduler, so plane i+1 overlaps plane i's result drain.
        for ci in range(c_blk):
            plane(ci * h_in, ci * h_out)
    else:
        def body(ci, carry):
            plane(pl.multiple_of(ci * h_in, h_in),
                  pl.multiple_of(ci * h_out, h_out))
            return carry
        jax.lax.fori_loop(0, c_blk, body, 0, unroll=8)


# --------------------------------------------------------------------------
# Wrapper.
# --------------------------------------------------------------------------
def bilinear_resize(x, out_hw, align_corners=False, *, vmem_budget_bytes=None):
    """Bilinear resize of an NCHW tensor to spatial size `out_hw` via Pallas."""
    n, c, h_in, w_in = x.shape
    h_out, w_out = int(out_hw[0]), int(out_hw[1])
    num_planes = n * c

    # bf16 inputs -> bf16 weights / intermediate (f32 MXU accumulation kept).
    # Note: for bf16 the intermediate is rounded to bf16 between the two matmuls.
    compute_dtype = jnp.bfloat16 if x.dtype == jnp.bfloat16 else jnp.float32
    x_item = jnp.dtype(x.dtype).itemsize
    cmp_item = jnp.dtype(compute_dtype).itemsize

    capacity = _vmem_capacity_bytes()
    budget = (int(vmem_budget_bytes) if vmem_budget_bytes is not None
              else max(capacity // 2, 16 * 1024 * 1024))

    c_blk, grid_planes, planes_pad, w_blk, n_w, w_pad = _choose_blocking(
        num_planes, h_in, w_in, h_out, w_out, x_item, cmp_item, budget)

    wh_np = _bilinear_matrix(h_in, h_out, align_corners)        # (H_out, H_in)
    wwt_np = _bilinear_matrix(w_in, w_out, align_corners).T     # (W_in, W_out)
    if w_pad > w_out:
        wwt_np = np.pad(wwt_np, ((0, 0), (0, w_pad - w_out)))
    wh = jnp.asarray(wh_np, dtype=compute_dtype)
    wwt = jnp.asarray(wwt_np, dtype=compute_dtype)

    # Flatten the plane axis in the wrapper (free layout plumbing); pad so every
    # block is full (no ragged blocks, padded planes are zeros and sliced away).
    x_flat = x.reshape(num_planes * h_in, w_in)
    if planes_pad > num_planes:
        x_flat = jnp.pad(x_flat, ((0, (planes_pad - num_planes) * h_in), (0, 0)))

    need = _block_vmem_bytes(c_blk, w_blk, h_in, w_in, h_out, x_item, cmp_item)
    vmem_limit = int(min(capacity, max(32 * 1024 * 1024, need + 4 * 1024 * 1024)))

    flops = 2 * num_planes * (h_in * w_in * w_out + h_out * h_in * w_out)
    bytes_accessed = (num_planes * (h_in * w_in + h_out * w_out) * x_item
                      + (wh.size + wwt.size) * cmp_item)
    cost = pl.CostEstimate(flops=int(flops), transcendentals=0,
                           bytes_accessed=int(bytes_accessed))

    out_flat = pl.pallas_call(
        _interp_kernel,
        out_shape=jax.ShapeDtypeStruct((planes_pad * h_out, w_pad), x.dtype),
        grid_spec=pltpu.PrefetchScalarGridSpec(
            num_scalar_prefetch=0,
            grid=(grid_planes, n_w),
            in_specs=[
                pl.BlockSpec((h_out, h_in), lambda b, wj: (0, 0)),          # W_h (shared)
                pl.BlockSpec((c_blk * h_in, w_in), lambda b, wj: (b, 0)),    # x plane block
                pl.BlockSpec((w_in, w_blk), lambda b, wj: (0, wj)),          # W_w^T cols
            ],
            out_specs=pl.BlockSpec((c_blk * h_out, w_blk), lambda b, wj: (b, wj)),
            scratch_shapes=[pltpu.VMEM((c_blk * h_in, w_blk), compute_dtype)],
        ),
        compiler_params=pltpu.CompilerParams(
            dimension_semantics=("parallel", "parallel"),
            vmem_limit_bytes=vmem_limit,
        ),
        cost_estimate=cost,
    )(wh, x_flat, wwt)

    out = out_flat.reshape(planes_pad, h_out, w_pad)[:num_planes, :, :w_out]
    return out.reshape(n, c, h_out, w_out)


class Interpolate:
    """JAX/Pallas equivalent of the PyTorch Interpolate module (bilinear)."""

    def __init__(self, scale_factor, mode="bilinear", align_corners=False):
        assert mode == "bilinear", "this Pallas port implements bilinear mode"
        self.scale_factor = scale_factor
        self.mode = mode
        self.align_corners = align_corners

    def __call__(self, x, *, vmem_budget_bytes=None):
        n, c, h_in, w_in = x.shape
        h_out = int(math.floor(h_in * self.scale_factor))
        w_out = int(math.floor(w_in * self.scale_factor))
        return bilinear_resize(x, (h_out, w_out), self.align_corners,
                               vmem_budget_bytes=vmem_budget_bytes)


if __name__ == "__main__":
    def ref_interp(xv, h_out, w_out, align):
        wh = jnp.asarray(_bilinear_matrix(xv.shape[2], h_out, align))
        ww = jnp.asarray(_bilinear_matrix(xv.shape[3], w_out, align))
        return jnp.einsum("oh,nchw,pw->ncop", wh, xv, ww)

    key = jax.random.PRNGKey(0)
    x = jax.random.normal(key, (2, 4, 16, 16), dtype=jnp.float32)  # NCHW

    # DPTSegHead's head uses align_corners=True; check both settings.
    for align in (True, False):
        y = jax.block_until_ready(
            Interpolate(scale_factor=2, mode="bilinear", align_corners=align)(x))
        assert y.shape == (2, 4, 32, 32), y.shape
        np.testing.assert_allclose(np.asarray(y),
                                   np.asarray(ref_interp(x, 32, 32, align)),
                                   rtol=1e-5, atol=1e-5)

    # Non-square spatial case + plane count that is not a multiple of the block.
    x2 = jax.random.normal(jax.random.PRNGKey(1), (1, 3, 16, 24), dtype=jnp.float32)
    y2 = jax.block_until_ready(
        Interpolate(scale_factor=2, mode="bilinear", align_corners=True)(x2))
    assert y2.shape == (1, 3, 32, 48), y2.shape
    np.testing.assert_allclose(np.asarray(y2),
                               np.asarray(ref_interp(x2, 32, 48, True)),
                               rtol=1e-5, atol=1e-5)

    # Force the W_out-tiling fallback (tiny VMEM budget), including lane padding
    # of W_out (400 -> 512) and a 2x4 grid.
    x3 = jax.random.normal(jax.random.PRNGKey(2), (1, 2, 16, 200), dtype=jnp.float32)
    y3 = jax.block_until_ready(
        Interpolate(scale_factor=2, mode="bilinear", align_corners=True)(
            x3, vmem_budget_bytes=300 * 1024))
    assert y3.shape == (1, 2, 32, 400), y3.shape
    np.testing.assert_allclose(np.asarray(y3),
                               np.asarray(ref_interp(x3, 32, 400, True)),
                               rtol=1e-5, atol=1e-5)

    print("KERNEL_OK")
</pallas_src>

<mosaic_0001>
module attributes {stable_mosaic.version = 11 : i64} {
  func.func @_interp_kernel(%arg0: i32, %arg1: i32, %arg2: memref<32x16xf32, #tpu.memory_space<vmem>>, %arg3: memref<64x16xf32, #tpu.memory_space<vmem>>, %arg4: memref<16x32xf32, #tpu.memory_space<vmem>>, %arg5: memref<128x32xf32, #tpu.memory_space<vmem>>, %arg6: memref<64x32xf32, #tpu.memory_space<vmem>>) attributes {dimension_semantics = [#tpu.dimension_semantics<parallel>, #tpu.dimension_semantics<parallel>], iteration_bounds = array<i64: 2, 1>, scalar_prefetch = 0 : i64, scratch_operands = 1 : i64, tpu.core_type = #tpu.core_type<tc>, window_params = [{pipeline_mode = #tpu.pipeline_mode<synchronous>, transform_indices = @transform_0, window_bounds = array<i64: 32, 16>}, {transform_indices = @transform_1, window_bounds = array<i64: 64, 16>}, {transform_indices = @transform_2, window_bounds = array<i64: 16, 32>}, {transform_indices = @transform_3, window_bounds = array<i64: 128, 32>}]} {
    %c0 = arith.constant 0 : index
    %c0_0 = arith.constant 0 : index
    %0 = vector.load %arg3[%c0, %c0_0] : memref<64x16xf32, #tpu.memory_space<vmem>>, vector<64x16xf32>
    %c0_1 = arith.constant 0 : index
    %c0_2 = arith.constant 0 : index
    %1 = vector.load %arg4[%c0_1, %c0_2] : memref<16x32xf32, #tpu.memory_space<vmem>>, vector<16x32xf32>
    %cst = arith.constant dense<0.000000e+00> : vector<64x32xf32>
    %2 = tpu.matmul %0, %1, %cst {dimension_numbers = #tpu.dot_dimension_numbers<[1], [0], [0], [1], [0, 0, 1, 1], [], []>} : vector<64x16xf32>, vector<16x32xf32>, vector<64x32xf32> -> vector<64x32xf32>
    %c0_3 = arith.constant 0 : index
    %c0_4 = arith.constant 0 : index
    %3 = vector.load %arg6[%c0_3, %c0_4] : memref<64x32xf32, #tpu.memory_space<vmem>>, vector<64x32xf32>
    tpu.vector_store %arg6[%c0_3, %c0_4], %2 {strides = array<i32>} : memref<64x32xf32, #tpu.memory_space<vmem>>, vector<64x32xf32>,
    %c0_5 = arith.constant 0 : index
    %c0_6 = arith.constant 0 : index
    %4 = vector.load %arg2[%c0_5, %c0_6] : memref<32x16xf32, #tpu.memory_space<vmem>>, vector<32x16xf32>
    %c0_7 = arith.constant 0 : index
    %c0_8 = arith.constant 0 : index
    %5 = vector.load %arg6[%c0_7, %c0_8] : memref<64x32xf32, #tpu.memory_space<vmem>>, vector<16x32xf32>
    %cst_9 = arith.constant dense<0.000000e+00> : vector<32x32xf32>
    %6 = tpu.matmul %4, %5, %cst_9 {dimension_numbers = #tpu.dot_dimension_numbers<[1], [0], [0], [1], [0, 0, 1, 1], [], []>} : vector<32x16xf32>, vector<16x32xf32>, vector<32x32xf32> -> vector<32x32xf32>
    %c0_10 = arith.constant 0 : index
    %c0_11 = arith.constant 0 : index
    %7 = vector.load %arg5[%c0_10, %c0_11] : memref<128x32xf32, #tpu.memory_space<vmem>>, vector<32x32xf32>
    tpu.vector_store %arg5[%c0_10, %c0_11], %6 {strides = array<i32>} : memref<128x32xf32, #tpu.memory_space<vmem>>, vector<32x32xf32>,
    %c16 = arith.constant 16 : index
    %c0_12 = arith.constant 0 : index
    %8 = vector.load %arg6[%c16, %c0_12] : memref<64x32xf32, #tpu.memory_space<vmem>>, vector<16x32xf32>
    %cst_13 = arith.constant dense<0.000000e+00> : vector<32x32xf32>
    %9 = tpu.matmul %4, %8, %cst_13 {dimension_numbers = #tpu.dot_dimension_numbers<[1], [0], [0], [1], [0, 0, 1, 1], [], []>} : vector<32x16xf32>, vector<16x32xf32>, vector<32x32xf32> -> vector<32x32xf32>
    %c32 = arith.constant 32 : index
    %c0_14 = arith.constant 0 : index
    %10 = vector.load %arg5[%c32, %c0_14] : memref<128x32xf32, #tpu.memory_space<vmem>>, vector<32x32xf32>
    tpu.vector_store %arg5[%c32, %c0_14], %9 {strides = array<i32>} : memref<128x32xf32, #tpu.memory_space<vmem>>, vector<32x32xf32>,
    %c32_15 = arith.constant 32 : index
    %c0_16 = arith.constant 0 : index
    %11 = vector.load %arg6[%c32_15, %c0_16] : memref<64x32xf32, #tpu.memory_space<vmem>>, vector<16x32xf32>
    %cst_17 = arith.constant dense<0.000000e+00> : vector<32x32xf32>
    %12 = tpu.matmul %4, %11, %cst_17 {dimension_numbers = #tpu.dot_dimension_numbers<[1], [0], [0], [1], [0, 0, 1, 1], [], []>} : vector<32x16xf32>, vector<16x32xf32>, vector<32x32xf32> -> vector<32x32xf32>
    %c64 = arith.constant 64 : index
    %c0_18 = arith.constant 0 : index
    %13 = vector.load %arg5[%c64, %c0_18] : memref<128x32xf32, #tpu.memory_space<vmem>>, vector<32x32xf32>
    tpu.vector_store %arg5[%c64, %c0_18], %12 {strides = array<i32>} : memref<128x32xf32, #tpu.memory_space<vmem>>, vector<32x32xf32>,
    %c48 = arith.constant 48 : index
    %c0_19 = arith.constant 0 : index
    %14 = vector.load %arg6[%c48, %c0_19] : memref<64x32xf32, #tpu.memory_space<vmem>>, vector<16x32xf32>
    %cst_20 = arith.constant dense<0.000000e+00> : vector<32x32xf32>
    %15 = tpu.matmul %4, %14, %cst_20 {dimension_numbers = #tpu.dot_dimension_numbers<[1], [0], [0], [1], [0, 0, 1, 1], [], []>} : vector<32x16xf32>, vector<16x32xf32>, vector<32x32xf32> -> vector<32x32xf32>
    %c96 = arith.constant 96 : index
    %c0_21 = arith.constant 0 : index
    %16 = vector.load %arg5[%c96, %c0_21] : memref<128x32xf32, #tpu.memory_space<vmem>>, vector<32x32xf32>
    tpu.vector_store %arg5[%c96, %c0_21], %15 {strides = array<i32>} : memref<128x32xf32, #tpu.memory_space<vmem>>, vector<32x32xf32>,
    return
  }
  func.func @transform_0(%arg0: i32, %arg1: i32) -> (i32, i32) {
    %c0_i32 = arith.constant 0 : i32
    %c0_i32_0 = arith.constant 0 : i32
    %c0_i32_1 = arith.constant 0 : i32
    return %c0_i32, %c0_i32_0 : i32, i32
  }
  func.func @transform_1(%arg0: i32, %arg1: i32) -> (i32, i32) {
    %c0_i32 = arith.constant 0 : i32
    %c0_i32_0 = arith.constant 0 : i32
    return %arg0, %c0_i32 : i32, i32
  }
  func.func @transform_2(%arg0: i32, %arg1: i32) -> (i32, i32) {
    %c0_i32 = arith.constant 0 : i32
    %c0_i32_0 = arith.constant 0 : i32
    return %c0_i32, %arg1 : i32, i32
  }
  func.func @transform_3(%arg0: i32, %arg1: i32) -> (i32, i32) {
    %c0_i32 = arith.constant 0 : i32
    return %arg0, %arg1 : i32, i32
  }
}

</mosaic_0001>

<llo_original>
// kernel: tpu_custom_call.1
$region0: #{tpu_custom_call.1}
  #allocation0 [shape = 'u32[]', space=smem, size = 0x4, offset = 0x4, fixed_abs, tag = 'smem constant byte address 0x4 - core index']
  #allocation1 [shape = 'u32[144,128]{1,0:T(1,128)}', space=vmem, size = 0x12000, scoped, tag = 'internal scratch']
  #allocation2 [shape = 'f32[64,32]{1,0:T(8,128)}', space=vmem, size = 0x8000, scoped, tag = 'scratch operand']
  %s0 = inlined_call_operand.vmem [shape: f32[32,16], index: 0, kind: input, shape index: {}]
  %s1 = inlined_call_operand.vmem [shape: f32[128,16], index: 1, kind: input, shape index: {}]
  %s2 = inlined_call_operand.vmem [shape: f32[16,32], index: 2, kind: input, shape index: {}]
  %s3 = inlined_call_operand.vmem [shape: f32[256,32], index: 3, kind: output, shape index: {}]
  %s4 = sld [smem:[#allocation0]]
  $region45: #{tpu_custom_call.1} parent=0
    _
  %s6 = ssub.s32 1, %s4
  %s7 = scalar_select 0, %s6, %s4
  loop: start=0, step=1, limit=4
  $region2: #{tpu_custom_call.1} parent=0 // loop_pre_header
    _
  $region3: #{tpu_custom_call.1} parent=0 // loop_header
    %s9 = sphi 0, %s13
    %p10 = scmp.ge.s32.totalorder %s9, 4
    %s16 = sphi 0, %s28
    %s17 = sphi 0, %s24
    %s18 = sphi 0, %s16
    %s19 = sphi 0, %s17
    %s20 = sphi 0, %s18
    %s21 = sphi 0, %s19
    %s29 = sphi 0, %s29
    %s31 = sphi 0, %s29
    %s32 = sphi 0, %s31
    %s46 = sphi 0, %s32
    %s52 = sphi 0, %s54
    %s55 = sphi 0, %s52
    %s56 = sphi 0, %s55
    %s72 = sphi 0, %s56
    %s78 = sphi 0, %s80
    %s81 = sphi 0, %s78
    %s82 = sphi 0, %s81
    %s98 = sphi 0, %s82
    %s106 = sphi 0, %s108
    %s109 = sphi 0, %s106
    %s110 = sphi 0, %s109
    %s126 = sphi 0, %s110
  $region4: #{tpu_custom_call.1} parent=0 // loop_header_branch
    %12 = sbr.rel (%p10) target = $region8
  $region5: #{tpu_custom_call.1} parent=0 // loop_body
    %s14 = ssub.s32 %s9, 1
    %s15 = ssub.s32 %s9, 2
    %s22 = sadd.s32 1, %s17
    %p23 = scmp.ge.s32.totalorder %s22, 1
    %s24 = scalar_select %p23, 0, %s22
    %s25 = sadd.s32 1, %s16
    %s26 = scalar_select %p23, %s25, %s16
    %p27 = scmp.ge.s32.totalorder %s26, 2
    %s28 = scalar_select %p27, 0, %s26
    %s30 = sadd.s32 %s29, 1
    %p33 = scmp.eq.s32.totalorder %s9, 1
    %p34 = scmp.ne.s32.totalorder %s29, %s31
    %p35 = scmp.eq.s32.totalorder %s9, 0
    %p36 = por %p34, %p35
    %p37 = scmp.ne.s32.totalorder %s29, %s31
    %p38 = scmp.eq.s32.totalorder %s14, 1
    %p39 = por %p37, %p38
    %p40 = scmp.ne.s32.totalorder %s31, %s32
    %p41 = scmp.eq.s32.totalorder %s14, 0
    %p42 = por %p40, %p41
    %p43 = scmp.ne.s32.totalorder %s31, %s32
    %p44 = scmp.eq.s32.totalorder %s15, 1
    %p45 = por %p43, %p44
    %p47 = scmp.ne.s32.totalorder %s32, %s46
    %p48 = scmp.eq.s32.totalorder %s15, 0
    %p49 = por %p47, %p48
    %s50 = ssub.s32 %s16, %s28
    %p51 = scmp.eq.s32.totalorder %s50, 0
    %s53 = sadd.s32 %s52, 1
    %s54 = scalar_select %p51, %s52, %s53
    %p57 = pneg %p51
    %p58 = scmp.eq.s32.totalorder %s9, 1
    %p59 = por %p57, %p58
    %p60 = scmp.ne.s32.totalorder %s52, %s55
    %p61 = scmp.eq.s32.totalorder %s9, 0
    %p62 = por %p60, %p61
    %p63 = scmp.ne.s32.totalorder %s52, %s55
    %p64 = scmp.eq.s32.totalorder %s14, 1
    %p65 = por %p63, %p64
    %p66 = scmp.ne.s32.totalorder %s55, %s56
    %p67 = scmp.eq.s32.totalorder %s14, 0
    %p68 = por %p66, %p67
    %p69 = scmp.ne.s32.totalorder %s55, %s56
    %p70 = scmp.eq.s32.totalorder %s15, 1
    %p71 = por %p69, %p70
    %p73 = scmp.ne.s32.totalorder %s56, %s72
    %p74 = scmp.eq.s32.totalorder %s15, 0
    %p75 = por %p73, %p74
    %s76 = ssub.s32 %s17, %s24
    %p77 = scmp.eq.s32.totalorder %s76, 0
    %s79 = sadd.s32 %s78, 1
    %s80 = scalar_select %p77, %s78, %s79
    %p83 = pneg %p77
    %p84 = scmp.eq.s32.totalorder %s9, 1
    %p85 = por %p83, %p84
    %p86 = scmp.ne.s32.totalorder %s78, %s81
    %p87 = scmp.eq.s32.totalorder %s9, 0
    %p88 = por %p86, %p87
    %p89 = scmp.ne.s32.totalorder %s78, %s81
    %p90 = scmp.eq.s32.totalorder %s14, 1
    %p91 = por %p89, %p90
    %p92 = scmp.ne.s32.totalorder %s81, %s82
    %p93 = scmp.eq.s32.totalorder %s14, 0
    %p94 = por %p92, %p93
    %p95 = scmp.ne.s32.totalorder %s81, %s82
    %p96 = scmp.eq.s32.totalorder %s15, 1
    %p97 = por %p95, %p96
    %p99 = scmp.ne.s32.totalorder %s82, %s98
    %p100 = scmp.eq.s32.totalorder %s15, 0
    %p101 = por %p99, %p100
    %s102 = ssub.s32 %s16, %s28
    %s103 = ssub.s32 %s17, %s24
    %s104 = sor.u32 %s102, %s103
    %p105 = scmp.eq.s32.totalorder %s104, 0
    %s107 = sadd.s32 %s106, 1
    %s108 = scalar_select %p105, %s106, %s107
    %p111 = pneg %p105
    %p112 = scmp.eq.s32.totalorder %s9, 1
    %p113 = por %p111, %p112
    %p114 = scmp.ne.s32.totalorder %s106, %s109
    %p115 = scmp.eq.s32.totalorder %s9, 0
    %p116 = por %p114, %p115
    %p117 = scmp.ne.s32.totalorder %s106, %s109
    %p118 = scmp.eq.s32.totalorder %s14, 1
    %p119 = por %p117, %p118
    %p120 = scmp.ne.s32.totalorder %s109, %s110
    %p121 = scmp.eq.s32.totalorder %s14, 0
    %p122 = por %p120, %p121
    %p123 = scmp.ne.s32.totalorder %s109, %s110
    %p124 = scmp.eq.s32.totalorder %s15, 1
    %p125 = por %p123, %p124
    %p127 = scmp.ne.s32.totalorder %s110, %s126
    %p128 = scmp.eq.s32.totalorder %s15, 0
    %p129 = por %p127, %p128
    %p130 = scmp.le.s32.totalorder 1, %s9
    %p131 = scmp.lt.s32.totalorder %s9, 3
    %p132 = pnand %p130, %p131
    %p133 = pneg %p132
    // Predicated region
    $region9: #{tpu_custom_call.1} parent=5 // pred_check
      _
    $region10: #{tpu_custom_call.1} parent=5 // pred_check_branch
      %135 = sbr.rel (%p132) target = $region12
    $region11: #{tpu_custom_call.1} parent=5 // pred_region
      %s136 = ssub.s32 %s9, 1
      // Predicated region
      $region13: #{tpu_custom_call.1} parent=11 // pred_check
        %p137 = pneg %p42
      $region14: #{tpu_custom_call.1} parent=11 // pred_check_branch
        %139 = sbr.rel (%p137) target = $region16
      $region15: #{tpu_custom_call.1} parent=11 // pred_region
        _
      $region16: #{tpu_custom_call.1} parent=11 // pred_fallthru
        _
      // Predicated region
      $region17: #{tpu_custom_call.1} parent=11 // pred_check
        %p140 = pneg %p94
      $region18: #{tpu_custom_call.1} parent=11 // pred_check_branch
        %142 = sbr.rel (%p140) target = $region20
      $region19: #{tpu_custom_call.1} parent=11 // pred_region
        %p143 = scmp.lt.s32.totalorder %s19, 0
        %s144 = scalar_select %p143, %s19, 0
        %s145 = smul.addr %s144, 8
        %s146 = scalar_lea.vmem %s2, %s145
      $region20: #{tpu_custom_call.1} parent=11 // pred_fallthru
        _
    $region12: #{tpu_custom_call.1} parent=5 // pred_fallthru
      _
    %p147 = scmp.lt.s32.totalorder %s9, 2
    // Predicated region
    $region21: #{tpu_custom_call.1} parent=5 // pred_check
      %p148 = pneg %p147
    $region22: #{tpu_custom_call.1} parent=5 // pred_check_branch
      %150 = sbr.rel (%p148) target = $region24
    $region23: #{tpu_custom_call.1} parent=5 // pred_region
      // Predicated region
      $region25: #{tpu_custom_call.1} parent=23 // pred_check
        %p151 = pneg %p62
      $region26: #{tpu_custom_call.1} parent=23 // pred_check_branch
        %153 = sbr.rel (%p151) target = $region28
      $region27: #{tpu_custom_call.1} parent=23 // pred_region
        %s154 = smul.u32 8, %s16
        %p155 = scmp.lt.s32.totalorder %s154, 15
        %s156 = scalar_select %p155, %s154, 15
        %s157 = smul.addr %s156, 8
        %s158 = scalar_lea.vmem %s1, %s157
        %s159 = smul.u32 8, %s16
      $region28: #{tpu_custom_call.1} parent=23 // pred_fallthru
        _
    $region24: #{tpu_custom_call.1} parent=5 // pred_fallthru
      _
    %p160 = scmp.le.s32.totalorder 1, %s9
    %p161 = scmp.lt.s32.totalorder %s9, 3
    %p162 = pnand %p160, %p161
    %p163 = pneg %p162
    // Predicated region
    $region29: #{tpu_custom_call.1} parent=5 // pred_check
      _
    $region30: #{tpu_custom_call.1} parent=5 // pred_check_branch
      %165 = sbr.rel (%p162) target = $region32
    $region31: #{tpu_custom_call.1} parent=5 // pred_region
      %s166 = ssub.s32 %s9, 1
      %p167 = pneg %p42
      %p168 = pneg %p39
      %s169 = smul.u32 8, %s18
      %p170 = scmp.lt.s32.totalorder %s169, 15
      %s171 = scalar_select %p170, %s169, 15
      %s172 = smul.addr %s171, 8
      %s173 = scalar_lea.vmem %s1, %s172
      %p174 = pneg %p68
      %p175 = pneg %p65
      %p176 = scmp.lt.s32.totalorder %s19, 0
      %s177 = scalar_select %p176, %s19, 0
      %s178 = smul.addr %s177, 8
      %s179 = scalar_lea.vmem %s2, %s178
      %p180 = pneg %p94
      %p181 = pneg %p91
      %p182 = pneg %p122
      %p183 = pneg %p119
      %s184 = smul.u32 16, %s18
      %p185 = scmp.lt.s32.totalorder %s184, 31
      %s186 = scalar_select %p185, %s184, 31
      %p187 = scmp.lt.s32.totalorder %s19, 0
      %s188 = scalar_select %p187, %s19, 0
      %s189 = sadd.s32 %s188, %s186
      %s190 = smul.addr %s189, 8
      %s191 = scalar_lea.vmem %s3, %s190
      %s192 = smul.u32 8, %s18
      %p193 = scmp.lt.s32.totalorder %s192, 15
      %s194 = scalar_select %p193, %s192, 15
      %s195 = smul.addr %s194, 8
      %s196 = scalar_lea.vmem %s1, %s195
      %s197 = smul.u32 8, %s18
      %p198 = scmp.lt.s32.totalorder %s19, 0
      %s199 = scalar_select %p198, %s19, 0
      %s200 = smul.addr %s199, 8
      %s201 = scalar_lea.vmem %s2, %s200
      %s202 = smul.u32 16, %s18
      %p203 = scmp.lt.s32.totalorder %s202, 31
      %s204 = scalar_select %p203, %s202, 31
      %p205 = scmp.lt.s32.totalorder %s19, 0
      %s206 = scalar_select %p205, %s19, 0
      %s207 = sadd.s32 %s206, %s204
      %s208 = smul.addr %s207, 8
      %s209 = scalar_lea.vmem %s3, %s208
      %s210 = smul.u32 16, %s18
      %v211 = vld [vmem:[%s196] sm:$0xff]
      %v212 = vld [vmem:[%s196 + $0x8] sm:$0xff]
      %v213 = vld [vmem:[%s196 + $0x10] sm:$0xff]
      %v214 = vld [vmem:[%s196 + $0x18] sm:$0xff]
      %v215 = vld [vmem:[%s196 + $0x20] sm:$0xff]
      %v216 = vld [vmem:[%s196 + $0x28] sm:$0xff]
      %v217 = vld [vmem:[%s196 + $0x30] sm:$0xff]
      %v218 = vld [vmem:[%s196 + $0x38] sm:$0xff]
      %v219 = vld [vmem:[%s201] sm:$0xff]
      %v220 = vld [vmem:[%s201 + $0x8] sm:$0xff]
      %vm221 = vcmask 130048
      %v223 = vsel %vm221, %v211, 0
      %v226 = vsel %vm221, %v212, 0
      %v229 = vsel %vm221, %v213, 0
      %v232 = vsel %vm221, %v214, 0
      %v235 = vsel %vm221, %v215, 0
      %v238 = vsel %vm221, %v216, 0
      %v241 = vsel %vm221, %v217, 0
      %v244 = vsel %vm221, %v218, 0
      %246 = vmatprep.subr.mxu0 0.0
      %247 = vmatpush1.msra.mxu0 %v219
      %248 = vmatprep.subr.mxu0 0.0
      %249 = vmatpush1.msra.mxu0 %v220
      %250 = vmatprep.subr.mxu0 0.0
      %251 = vmatpush1.msra.mxu0 0.0
      %252 = vmatprep.subr.mxu0 0.0
      %253 = vmatpush1.msra.mxu0 0.0
      %254 = vmatprep.subr.mxu0 0.0
      %255 = vmatpush1.msra.mxu0 0.0
      %256 = vmatprep.subr.mxu0 0.0
      %257 = vmatpush1.msra.mxu0 0.0
      %258 = vmatprep.subr.mxu0 0.0
      %259 = vmatpush1.msra.mxu0 0.0
      %260 = vmatprep.subr.mxu0 0.0
      %261 = vmatpush1.msra.mxu0 0.0
      %262 = vmatprep.subr.mxu0 0.0
      %263 = vmatpush1.msra.mxu0 0.0
      %264 = vmatprep.subr.mxu0 0.0
      %265 = vmatpush1.msra.mxu0 0.0
      %266 = vmatprep.subr.mxu0 0.0
      %267 = vmatpush1.msra.mxu0 0.0
      %268 = vmatprep.subr.mxu0 0.0
      %269 = vmatpush1.msra.mxu0 0.0
      %270 = vmatprep.subr.mxu0 0.0
      %271 = vmatpush1.msra.mxu0 0.0
      %272 = vmatprep.subr.mxu0 0.0
      %273 = vmatpush1.msra.mxu0 0.0
      %274 = vmatprep.subr.mxu0 0.0
      %275 = vmatpush1.msra.mxu0 0.0
      %276 = vmatprep.subr.mxu0 0.0
      %277 = vmatpush1.msra.mxu0 0.0
      %278 = vmatprep.subr.mxu0 0.0
      %279 = vmatpush1.msra.mxu0 0.0
      %280 = vmatprep.subr.mxu0 0.0
      %281 = vmatpush1.msra.mxu0 0.0
      %282 = vmatprep.subr.mxu0 0.0
      %283 = vmatpush1.msra.mxu0 0.0
      %284 = vmatprep.subr.mxu0 0.0
      %285 = vmatpush1.msra.mxu0 0.0
      %286 = vmatprep.subr.mxu0 0.0
      %287 = vmatpush1.msra.mxu0 0.0
      %288 = vmatprep.subr.mxu0 0.0
      %289 = vmatpush1.msra.mxu0 0.0
      %290 = vmatprep.subr.mxu0 0.0
      %291 = vmatpush1.msra.mxu0 0.0
      %292 = vmatprep.subr.mxu0 0.0
      %293 = vmatpush1.msra.mxu0 0.0
      %294 = vmatprep.subr.mxu0 0.0
      %295 = vmatpush1.msra.mxu0 0.0
      %296 = vmatprep.subr.mxu0 0.0
      %297 = vmatpush1.msra.mxu0 0.0
      %298 = vmatprep.subr.mxu0 0.0
      %299 = vmatpush1.msra.mxu0 0.0
      %300 = vmatprep.subr.mxu0 0.0
      %301 = vmatpush1.msra.mxu0 0.0
      %302 = vmatprep.subr.mxu0 0.0
      %303 = vmatpush1.msra.mxu0 0.0
      %304 = vmatprep.subr.mxu0 0.0
      %305 = vmatpush1.msra.mxu0 0.0
      %306 = vmatprep.subr.mxu0 0.0
      %307 = vmatpush1.msra.mxu0 0.0
      %308 = vmatprep.subr.mxu0 0.0
      %309 = vmatpush1.msra.mxu0 0.0
      %310 = vmatprep.mubr.f32.mxu0 0.0
      %311 = vmatmul.mubr.f32.gmra.mrb[0].mxu0 %v223
      %v312 = vpop.f32.mrb[0].mxu0
      %v313 = vadd.f32 0.0, %v312
      %v314 = vpop.f32.mrb[0].mxu0
      %315 = vmatprep.mubr.f32.mxu0 0.0
      %316 = vmatmul.mubr.f32.gmra.mrb[0].mxu0 %v226
      %v317 = vpop.f32.mrb[0].mxu0
      %v318 = vadd.f32 0.0, %v317
      %v319 = vpop.f32.mrb[0].mxu0
      %320 = vmatprep.mubr.f32.mxu0 0.0
      %321 = vmatmul.mubr.f32.gmra.mrb[0].mxu0 %v229
      %v322 = vpop.f32.mrb[0].mxu0
      %v323 = vadd.f32 0.0, %v322
      %v324 = vpop.f32.mrb[0].mxu0
      %325 = vmatprep.mubr.f32.mxu0 0.0
      %326 = vmatmul.mubr.f32.gmra.mrb[0].mxu0 %v232
      %v327 = vpop.f32.mrb[0].mxu0
      %v328 = vadd.f32 0.0, %v327
      %v329 = vpop.f32.mrb[0].mxu0
      %330 = vmatprep.mubr.f32.mxu0 0.0
      %331 = vmatmul.mubr.f32.gmra.mrb[0].mxu0 %v235
      %v332 = vpop.f32.mrb[0].mxu0
      %v333 = vadd.f32 0.0, %v332
      %v334 = vpop.f32.mrb[0].mxu0
      %335 = vmatprep.mubr.f32.mxu0 0.0
      %336 = vmatmul.mubr.f32.gmra.mrb[0].mxu0 %v238
      %v337 = vpop.f32.mrb[0].mxu0
      %v338 = vadd.f32 0.0, %v337
      %v339 = vpop.f32.mrb[0].mxu0
      %340 = vmatprep.mubr.f32.mxu0 0.0
      %341 = vmatmul.mubr.f32.gmra.mrb[0].mxu0 %v241
      %v342 = vpop.f32.mrb[0].mxu0
      %v343 = vadd.f32 0.0, %v342
      %v344 = vpop.f32.mrb[0].mxu0
      %345 = vmatprep.mubr.f32.mxu0 0.0
      %346 = vmatmul.mubr.f32.gmra.mrb[0].mxu0 %v244
      %v347 = vpop.f32.mrb[0].mxu0
      %v348 = vadd.f32 0.0, %v347
      %v349 = vpop.f32.mrb[0].mxu0
      %350 = vdwg.mxu0
      %vm351 = vcmask 261120
      %352 = vst.msk [vmem:[#allocation2] sm:$0xff] %vm351, %v313
      %353 = vst.msk [vmem:[#allocation2 + $0x8] sm:$0xff] %vm351, %v318
      %354 = vst.msk [vmem:[#allocation2 + $0x10] sm:$0xff] %vm351, %v323
      %355 = vst.msk [vmem:[#allocation2 + $0x18] sm:$0xff] %vm351, %v328
      %356 = vst.msk [vmem:[#allocation2 + $0x20] sm:$0xff] %vm351, %v333
      %357 = vst.msk [vmem:[#allocation2 + $0x28] sm:$0xff] %vm351, %v338
      %358 = vst.msk [vmem:[#allocation2 + $0x30] sm:$0xff] %vm351, %v343
      %359 = vst.msk [vmem:[#allocation2 + $0x38] sm:$0xff] %vm351, %v348
      %v360 = vld [vmem:[%s0] sm:$0xff]
      %v361 = vld [vmem:[%s0 + $0x8] sm:$0xff]
      %v362 = vld [vmem:[%s0 + $0x10] sm:$0xff]
      %v363 = vld [vmem:[%s0 + $0x18] sm:$0xff]
      %v364 = vld [vmem:[#allocation2] sm:$0xff]
      %v365 = vld [vmem:[#allocation2 + $0x8] sm:$0xff]
      %v367 = vsel %vm221, %v360, 0
      %v370 = vsel %vm221, %v361, 0
      %v373 = vsel %vm221, %v362, 0
      %v376 = vsel %vm221, %v363, 0
      %378 = vmatprep.subr.mxu0 0.0
      %379 = vmatpush1.msra.mxu0 %v364
      %380 = vmatprep.subr.mxu0 0.0
      %381 = vmatpush1.msra.mxu0 %v365
      %382 = vmatprep.subr.mxu0 0.0
      %383 = vmatpush1.msra.mxu0 0.0
      %384 = vmatprep.subr.mxu0 0.0
      %385 = vmatpush1.msra.mxu0 0.0
      %386 = vmatprep.subr.mxu0 0.0
      %387 = vmatpush1.msra.mxu0 0.0
      %388 = vmatprep.subr.mxu0 0.0
      %389 = vmatpush1.msra.mxu0 0.0
      %390 = vmatprep.subr.mxu0 0.0
      %391 = vmatpush1.msra.mxu0 0.0
      %392 = vmatprep.subr.mxu0 0.0
      %393 = vmatpush1.msra.mxu0 0.0
      %394 = vmatprep.subr.mxu0 0.0
      %395 = vmatpush1.msra.mxu0 0.0
      %396 = vmatprep.subr.mxu0 0.0
      %397 = vmatpush1.msra.mxu0 0.0
      %398 = vmatprep.subr.mxu0 0.0
      %399 = vmatpush1.msra.mxu0 0.0
      %400 = vmatprep.subr.mxu0 0.0
      %401 = vmatpush1.msra.mxu0 0.0
      %402 = vmatprep.subr.mxu0 0.0
      %403 = vmatpush1.msra.mxu0 0.0
      %404 = vmatprep.subr.mxu0 0.0
      %405 = vmatpush1.msra.mxu0 0.0
      %406 = vmatprep.subr.mxu0 0.0
      %407 = vmatpush1.msra.mxu0 0.0
      %408 = vmatprep.subr.mxu0 0.0
      %409 = vmatpush1.msra.mxu0 0.0
      %410 = vmatprep.subr.mxu0 0.0
      %411 = vmatpush1.msra.mxu0 0.0
      %412 = vmatprep.subr.mxu0 0.0
      %413 = vmatpush1.msra.mxu0 0.0
      %414 = vmatprep.subr.mxu0 0.0
      %415 = vmatpush1.msra.mxu0 0.0
      %416 = vmatprep.subr.mxu0 0.0
      %417 = vmatpush1.msra.mxu0 0.0
      %418 = vmatprep.subr.mxu0 0.0
      %419 = vmatpush1.msra.mxu0 0.0
      %420 = vmatprep.subr.mxu0 0.0
      %421 = vmatpush1.msra.mxu0 0.0
      %422 = vmatprep.subr.mxu0 0.0
      %423 = vmatpush1.msra.mxu0 0.0
      %424 = vmatprep.subr.mxu0 0.0
      %425 = vmatpush1.msra.mxu0 0.0
      %426 = vmatprep.subr.mxu0 0.0
      %427 = vmatpush1.msra.mxu0 0.0
      %428 = vmatprep.subr.mxu0 0.0
      %429 = vmatpush1.msra.mxu0 0.0
      %430 = vmatprep.subr.mxu0 0.0
      %431 = vmatpush1.msra.mxu0 0.0
      %432 = vmatprep.subr.mxu0 0.0
      %433 = vmatpush1.msra.mxu0 0.0
      %434 = vmatprep.subr.mxu0 0.0
      %435 = vmatpush1.msra.mxu0 0.0
      %436 = vmatprep.subr.mxu0 0.0
      %437 = vmatpush1.msra.mxu0 0.0
      %438 = vmatprep.subr.mxu0 0.0
      %439 = vmatpush1.msra.mxu0 0.0
      %440 = vmatprep.subr.mxu0 0.0
      %441 = vmatpush1.msra.mxu0 0.0
      %442 = vmatprep.mubr.f32.mxu0 0.0
      %443 = vmatmul.mubr.f32.gmra.mrb[0].mxu0 %v367
      %v444 = vpop.f32.mrb[0].mxu0
      %v445 = vadd.f32 0.0, %v444
      %v446 = vpop.f32.mrb[0].mxu0
      %447 = vmatprep.mubr.f32.mxu0 0.0
      %448 = vmatmul.mubr.f32.gmra.mrb[0].mxu0 %v370
      %v449 = vpop.f32.mrb[0].mxu0
      %v450 = vadd.f32 0.0, %v449
      %v451 = vpop.f32.mrb[0].mxu0
      %452 = vmatprep.mubr.f32.mxu0 0.0
      %453 = vmatmul.mubr.f32.gmra.mrb[0].mxu0 %v373
      %v454 = vpop.f32.mrb[0].mxu0
      %v455 = vadd.f32 0.0, %v454
      %v456 = vpop.f32.mrb[0].mxu0
      %457 = vmatprep.mubr.f32.mxu0 0.0
      %458 = vmatmul.mubr.f32.gmra.mrb[0].mxu0 %v376
      %v459 = vpop.f32.mrb[0].mxu0
      %v460 = vadd.f32 0.0, %v459
      %v461 = vpop.f32.mrb[0].mxu0
      %462 = vdwg.mxu0
      %463 = vst.msk [vmem:[%s209] sm:$0xff] %vm351, %v445
      %464 = vst.msk [vmem:[%s209 + $0x8] sm:$0xff] %vm351, %v450
      %465 = vst.msk [vmem:[%s209 + $0x10] sm:$0xff] %vm351, %v455
      %466 = vst.msk [vmem:[%s209 + $0x18] sm:$0xff] %vm351, %v460
      %v467 = vld [vmem:[#allocation2 + $0x10] sm:$0xff]
      %v468 = vld [vmem:[#allocation2 + $0x18] sm:$0xff]
      %469 = vmatprep.subr.mxu0 0.0
      %470 = vmatpush1.msra.mxu0 %v467
      %471 = vmatprep.subr.mxu0 0.0
      %472 = vmatpush1.msra.mxu0 %v468
      %473 = vmatprep.subr.mxu0 0.0
      %474 = vmatpush1.msra.mxu0 0.0
      %475 = vmatprep.subr.mxu0 0.0
      %476 = vmatpush1.msra.mxu0 0.0
      %477 = vmatprep.subr.mxu0 0.0
      %478 = vmatpush1.msra.mxu0 0.0
      %479 = vmatprep.subr.mxu0 0.0
      %480 = vmatpush1.msra.mxu0 0.0
      %481 = vmatprep.subr.mxu0 0.0
      %482 = vmatpush1.msra.mxu0 0.0
      %483 = vmatprep.subr.mxu0 0.0
      %484 = vmatpush1.msra.mxu0 0.0
      %485 = vmatprep.subr.mxu0 0.0
      %486 = vmatpush1.msra.mxu0 0.0
      %487 = vmatprep.subr.mxu0 0.0
      %488 = vmatpush1.msra.mxu0 0.0
      %489 = vmatprep.subr.mxu0 0.0
      %490 = vmatpush1.msra.mxu0 0.0
      %491 = vmatprep.subr.mxu0 0.0
      %492 = vmatpush1.msra.mxu0 0.0
      %493 = vmatprep.subr.mxu0 0.0
      %494 = vmatpush1.msra.mxu0 0.0
      %495 = vmatprep.subr.mxu0 0.0
      %496 = vmatpush1.msra.mxu0 0.0
      %497 = vmatprep.subr.mxu0 0.0
      %498 = vmatpush1.msra.mxu0 0.0
      %499 = vmatprep.subr.mxu0 0.0
      %500 = vmatpush1.msra.mxu0 0.0
      %501 = vmatprep.subr.mxu0 0.0
      %502 = vmatpush1.msra.mxu0 0.0
      %503 = vmatprep.subr.mxu0 0.0
      %504 = vmatpush1.msra.mxu0 0.0
      %505 = vmatprep.subr.mxu0 0.0
      %506 = vmatpush1.msra.mxu0 0.0
      %507 = vmatprep.subr.mxu0 0.0
      %508 = vmatpush1.msra.mxu0 0.0
      %509 = vmatprep.subr.mxu0 0.0
      %510 = vmatpush1.msra.mxu0 0.0
      %511 = vmatprep.subr.mxu0 0.0
      %512 = vmatpush1.msra.mxu0 0.0
      %513 = vmatprep.subr.mxu0 0.0
      %514 = vmatpush1.msra.mxu0 0.0
      %515 = vmatprep.subr.mxu0 0.0
      %516 = vmatpush1.msra.mxu0 0.0
      %517 = vmatprep.subr.mxu0 0.0
      %518 = vmatpush1.msra.mxu0 0.0
      %519 = vmatprep.subr.mxu0 0.0
      %520 = vmatpush1.msra.mxu0 0.0
      %521 = vmatprep.subr.mxu0 0.0
      %522 = vmatpush1.msra.mxu0 0.0
      %523 = vmatprep.subr.mxu0 0.0
      %524 = vmatpush1.msra.mxu0 0.0
      %525 = vmatprep.subr.mxu0 0.0
      %526 = vmatpush1.msra.mxu0 0.0
      %527 = vmatprep.subr.mxu0 0.0
      %528 = vmatpush1.msra.mxu0 0.0
      %529 = vmatprep.subr.mxu0 0.0
      %530 = vmatpush1.msra.mxu0 0.0
      %531 = vmatprep.subr.mxu0 0.0
      %532 = vmatpush1.msra.mxu0 0.0
      %533 = vmatprep.mubr.f32.mxu0 0.0
      %534 = vmatmul.mubr.f32.gmra.mrb[0].mxu0 %v367
      %v535 = vpop.f32.mrb[0].mxu0
      %v536 = vadd.f32 0.0, %v535
      %v537 = vpop.f32.mrb[0].mxu0
      %538 = vmatprep.mubr.f32.mxu0 0.0
      %539 = vmatmul.mubr.f32.gmra.mrb[0].mxu0 %v370
      %v540 = vpop.f32.mrb[0].mxu0
      %v541 = vadd.f32 0.0, %v540
      %v542 = vpop.f32.mrb[0].mxu0
      %543 = vmatprep.mubr.f32.mxu0 0.0
      %544 = vmatmul.mubr.f32.gmra.mrb[0].mxu0 %v373
      %v545 = vpop.f32.mrb[0].mxu0
      %v546 = vadd.f32 0.0, %v545
      %v547 = vpop.f32.mrb[0].mxu0
      %548 = vmatprep.mubr.f32.mxu0 0.0
      %549 = vmatmul.mubr.f32.gmra.mrb[0].mxu0 %v376
      %v550 = vpop.f32.mrb[0].mxu0
      %v551 = vadd.f32 0.0, %v550
      %v552 = vpop.f32.mrb[0].mxu0
      %553 = vdwg.mxu0
      %554 = vst.msk [vmem:[%s209 + $0x20] sm:$0xff] %vm351, %v536
      %555 = vst.msk [vmem:[%s209 + $0x28] sm:$0xff] %vm351, %v541
      %556 = vst.msk [vmem:[%s209 + $0x30] sm:$0xff] %vm351, %v546
      %557 = vst.msk [vmem:[%s209 + $0x38] sm:$0xff] %vm351, %v551
      %v558 = vld [vmem:[#allocation2 + $0x20] sm:$0xff]
      %v559 = vld [vmem:[#allocation2 + $0x28] sm:$0xff]
      %560 = vmatprep.subr.mxu0 0.0
      %561 = vmatpush1.msra.mxu0 %v558
      %562 = vmatprep.subr.mxu0 0.0
      %563 = vmatpush1.msra.mxu0 %v559
      %564 = vmatprep.subr.mxu0 0.0
      %565 = vmatpush1.msra.mxu0 0.0
      %566 = vmatprep.subr.mxu0 0.0
      %567 = vmatpush1.msra.mxu0 0.0
      %568 = vmatprep.subr.mxu0 0.0
      %569 = vmatpush1.msra.mxu0 0.0
      %570 = vmatprep.subr.mxu0 0.0
      %571 = vmatpush1.msra.mxu0 0.0
      %572 = vmatprep.subr.mxu0 0.0
      %573 = vmatpush1.msra.mxu0 0.0
      %574 = vmatprep.subr.mxu0 0.0
      %575 = vmatpush1.msra.mxu0 0.0
      %576 = vmatprep.subr.mxu0 0.0
      %577 = vmatpush1.msra.mxu0 0.0
      %578 = vmatprep.subr.mxu0 0.0
      %579 = vmatpush1.msra.mxu0 0.0
      %580 = vmatprep.subr.mxu0 0.0
      %581 = vmatpush1.msra.mxu0 0.0
      %582 = vmatprep.subr.mxu0 0.0
      %583 = vmatpush1.msra.mxu0 0.0
      %584 = vmatprep.subr.mxu0 0.0
      %585 = vmatpush1.msra.mxu0 0.0
      %586 = vmatprep.subr.mxu0 0.0
      %587 = vmatpush1.msra.mxu0 0.0
      %588 = vmatprep.subr.mxu0 0.0
      %589 = vmatpush1.msra.mxu0 0.0
      %590 = vmatprep.subr.mxu0 0.0
      %591 = vmatpush1.msra.mxu0 0.0
      %592 = vmatprep.subr.mxu0 0.0
      %593 = vmatpush1.msra.mxu0 0.0
      %594 = vmatprep.subr.mxu0 0.0
      %595 = vmatpush1.msra.mxu0 0.0
      %596 = vmatprep.subr.mxu0 0.0
      %597 = vmatpush1.msra.mxu0 0.0
      %598 = vmatprep.subr.mxu0 0.0
      %599 = vmatpush1.msra.mxu0 0.0
      %600 = vmatprep.subr.mxu0 0.0
      %601 = vmatpush1.msra.mxu0 0.0
      %602 = vmatprep.subr.mxu0 0.0
      %603 = vmatpush1.msra.mxu0 0.0
      %604 = vmatprep.subr.mxu0 0.0
      %605 = vmatpush1.msra.mxu0 0.0
      %606 = vmatprep.subr.mxu0 0.0
      %607 = vmatpush1.msra.mxu0 0.0
      %608 = vmatprep.subr.mxu0 0.0
      %609 = vmatpush1.msra.mxu0 0.0
      %610 = vmatprep.subr.mxu0 0.0
      %611 = vmatpush1.msra.mxu0 0.0
      %612 = vmatprep.subr.mxu0 0.0
      %613 = vmatpush1.msra.mxu0 0.0
      %614 = vmatprep.subr.mxu0 0.0
      %615 = vmatpush1.msra.mxu0 0.0
      %616 = vmatprep.subr.mxu0 0.0
      %617 = vmatpush1.msra.mxu0 0.0
      %618 = vmatprep.subr.mxu0 0.0
      %619 = vmatpush1.msra.mxu0 0.0
      %620 = vmatprep.subr.mxu0 0.0
      %621 = vmatpush1.msra.mxu0 0.0
      %622 = vmatprep.subr.mxu0 0.0
      %623 = vmatpush1.msra.mxu0 0.0
      %624 = vmatprep.mubr.f32.mxu0 0.0
      %625 = vmatmul.mubr.f32.gmra.mrb[0].mxu0 %v367
      %v626 = vpop.f32.mrb[0].mxu0
      %v627 = vadd.f32 0.0, %v626
      %v628 = vpop.f32.mrb[0].mxu0
      %629 = vmatprep.mubr.f32.mxu0 0.0
      %630 = vmatmul.mubr.f32.gmra.mrb[0].mxu0 %v370
      %v631 = vpop.f32.mrb[0].mxu0
      %v632 = vadd.f32 0.0, %v631
      %v633 = vpop.f32.mrb[0].mxu0
      %634 = vmatprep.mubr.f32.mxu0 0.0
      %635 = vmatmul.mubr.f32.gmra.mrb[0].mxu0 %v373
      %v636 = vpop.f32.mrb[0].mxu0
      %v637 = vadd.f32 0.0, %v636
      %v638 = vpop.f32.mrb[0].mxu0
      %639 = vmatprep.mubr.f32.mxu0 0.0
      %640 = vmatmul.mubr.f32.gmra.mrb[0].mxu0 %v376
      %v641 = vpop.f32.mrb[0].mxu0
      %v642 = vadd.f32 0.0, %v641
      %v643 = vpop.f32.mrb[0].mxu0
      %644 = vdwg.mxu0
      %645 = vst.msk [vmem:[%s209 + $0x40] sm:$0xff] %vm351, %v627
      %646 = vst.msk [vmem:[%s209 + $0x48] sm:$0xff] %vm351, %v632
      %647 = vst.msk [vmem:[%s209 + $0x50] sm:$0xff] %vm351, %v637
      %648 = vst.msk [vmem:[%s209 + $0x58] sm:$0xff] %vm351, %v642
      %v649 = vld [vmem:[#allocation2 + $0x30] sm:$0xff]
      %v650 = vld [vmem:[#allocation2 + $0x38] sm:$0xff]
      %651 = vmatprep.subr.mxu0 0.0
      %652 = vmatpush1.msra.mxu0 %v649
      %653 = vmatprep.subr.mxu0 0.0
      %654 = vmatpush1.msra.mxu0 %v650
      %655 = vmatprep.subr.mxu0 0.0
      %656 = vmatpush1.msra.mxu0 0.0
      %657 = vmatprep.subr.mxu0 0.0
      %658 = vmatpush1.msra.mxu0 0.0
      %659 = vmatprep.subr.mxu0 0.0
      %660 = vmatpush1.msra.mxu0 0.0
      %661 = vmatprep.subr.mxu0 0.0
      %662 = vmatpush1.msra.mxu0 0.0
      %663 = vmatprep.subr.mxu0 0.0
      %664 = vmatpush1.msra.mxu0 0.0
      %665 = vmatprep.subr.mxu0 0.0
      %666 = vmatpush1.msra.mxu0 0.0
      %667 = vmatprep.subr.mxu0 0.0
      %668 = vmatpush1.msra.mxu0 0.0
      %669 = vmatprep.subr.mxu0 0.0
      %670 = vmatpush1.msra.mxu0 0.0
      %671 = vmatprep.subr.mxu0 0.0
      %672 = vmatpush1.msra.mxu0 0.0
      %673 = vmatprep.subr.mxu0 0.0
      %674 = vmatpush1.msra.mxu0 0.0
      %675 = vmatprep.subr.mxu0 0.0
      %676 = vmatpush1.msra.mxu0 0.0
      %677 = vmatprep.subr.mxu0 0.0
      %678 = vmatpush1.msra.mxu0 0.0
      %679 = vmatprep.subr.mxu0 0.0
      %680 = vmatpush1.msra.mxu0 0.0
      %681 = vmatprep.subr.mxu0 0.0
      %682 = vmatpush1.msra.mxu0 0.0
      %683 = vmatprep.subr.mxu0 0.0
      %684 = vmatpush1.msra.mxu0 0.0
      %685 = vmatprep.subr.mxu0 0.0
      %686 = vmatpush1.msra.mxu0 0.0
      %687 = vmatprep.subr.mxu0 0.0
      %688 = vmatpush1.msra.mxu0 0.0
      %689 = vmatprep.subr.mxu0 0.0
      %690 = vmatpush1.msra.mxu0 0.0
      %691 = vmatprep.subr.mxu0 0.0
      %692 = vmatpush1.msra.mxu0 0.0
      %693 = vmatprep.subr.mxu0 0.0
      %694 = vmatpush1.msra.mxu0 0.0
      %695 = vmatprep.subr.mxu0 0.0
      %696 = vmatpush1.msra.mxu0 0.0
      %697 = vmatprep.subr.mxu0 0.0
      %698 = vmatpush1.msra.mxu0 0.0
      %699 = vmatprep.subr.mxu0 0.0
      %700 = vmatpush1.msra.mxu0 0.0
      %701 = vmatprep.subr.mxu0 0.0
      %702 = vmatpush1.msra.mxu0 0.0
      %703 = vmatprep.subr.mxu0 0.0
      %704 = vmatpush1.msra.mxu0 0.0
      %705 = vmatprep.subr.mxu0 0.0
      %706 = vmatpush1.msra.mxu0 0.0
      %707 = vmatprep.subr.mxu0 0.0
      %708 = vmatpush1.msra.mxu0 0.0
      %709 = vmatprep.subr.mxu0 0.0
      %710 = vmatpush1.msra.mxu0 0.0
      %711 = vmatprep.subr.mxu0 0.0
      %712 = vmatpush1.msra.mxu0 0.0
      %713 = vmatprep.subr.mxu0 0.0
      %714 = vmatpush1.msra.mxu0 0.0
      %715 = vmatprep.mubr.f32.mxu0 0.0
      %716 = vmatmul.mubr.f32.gmra.mrb[0].mxu0 %v367
      %v717 = vpop.f32.mrb[0].mxu0
      %v718 = vadd.f32 0.0, %v717
      %v719 = vpop.f32.mrb[0].mxu0
      %720 = vmatprep.mubr.f32.mxu0 0.0
      %721 = vmatmul.mubr.f32.gmra.mrb[0].mxu0 %v370
      %v722 = vpop.f32.mrb[0].mxu0
      %v723 = vadd.f32 0.0, %v722
      %v724 = vpop.f32.mrb[0].mxu0
      %725 = vmatprep.mubr.f32.mxu0 0.0
      %726 = vmatmul.mubr.f32.gmra.mrb[0].mxu0 %v373
      %v727 = vpop.f32.mrb[0].mxu0
      %v728 = vadd.f32 0.0, %v727
      %v729 = vpop.f32.mrb[0].mxu0
      %730 = vmatprep.mubr.f32.mxu0 0.0
      %731 = vmatmul.mubr.f32.gmra.mrb[0].mxu0 %v376
      %v732 = vpop.f32.mrb[0].mxu0
      %v733 = vadd.f32 0.0, %v732
      %v734 = vpop.f32.mrb[0].mxu0
      %735 = vdwg.mxu0
      %736 = vst.msk [vmem:[%s209 + $0x60] sm:$0xff] %vm351, %v718
      %737 = vst.msk [vmem:[%s209 + $0x68] sm:$0xff] %vm351, %v723
      %738 = vst.msk [vmem:[%s209 + $0x70] sm:$0xff] %vm351, %v728
      %739 = vst.msk [vmem:[%s209 + $0x78] sm:$0xff] %vm351, %v733
      %s740 = smul.u32 16, %s18
      %p741 = scmp.lt.s32.totalorder %s740, 31
      %s742 = scalar_select %p741, %s740, 31
      %p743 = scmp.lt.s32.totalorder %s19, 0
      %s744 = scalar_select %p743, %s19, 0
      %s745 = sadd.s32 %s744, %s742
      %s746 = smul.addr %s745, 8
      %s747 = scalar_lea.vmem %s3, %s746
      // Predicated region
      $region33: #{tpu_custom_call.1} parent=31 // pred_check
        %p748 = pneg %p119
      $region34: #{tpu_custom_call.1} parent=31 // pred_check_branch
        %750 = sbr.rel (%p748) target = $region36
      $region35: #{tpu_custom_call.1} parent=31 // pred_region
        %s751 = smul.u32 16, %s18
      $region36: #{tpu_custom_call.1} parent=31 // pred_fallthru
        _
    $region32: #{tpu_custom_call.1} parent=5 // pred_fallthru
      _
    %p752 = scmp.le.s32.totalorder 2, %s9
    // Predicated region
    $region37: #{tpu_custom_call.1} parent=5 // pred_check
      %p753 = pneg %p752
    $region38: #{tpu_custom_call.1} parent=5 // pred_check_branch
      %755 = sbr.rel (%p753) target = $region40
    $region39: #{tpu_custom_call.1} parent=5 // pred_region
      %s756 = ssub.s32 %s9, 2
      // Predicated region
      $region41: #{tpu_custom_call.1} parent=39 // pred_check
        %p757 = pneg %p125
      $region42: #{tpu_custom_call.1} parent=39 // pred_check_branch
        %759 = sbr.rel (%p757) target = $region44
      $region43: #{tpu_custom_call.1} parent=39 // pred_region
        %s760 = smul.u32 16, %s20
        %p761 = scmp.lt.s32.totalorder %s760, 31
        %s762 = scalar_select %p761, %s760, 31
        %p763 = scmp.lt.s32.totalorder %s21, 0
        %s764 = scalar_select %p763, %s21, 0
        %s765 = sadd.s32 %s764, %s762
        %s766 = smul.addr %s765, 8
        %s767 = scalar_lea.vmem %s3, %s766
      $region44: #{tpu_custom_call.1} parent=39 // pred_fallthru
        _
    $region40: #{tpu_custom_call.1} parent=5 // pred_fallthru
      _
  $region6: #{tpu_custom_call.1} parent=0 // loop_footer
    %s13 = sadd.s32 1, %s9
  $region7: #{tpu_custom_call.1} parent=0 // loop_footer_branch
    %8 = sbr.rel target = $region3
  $region8: #{tpu_custom_call.1} parent=0 // loop_exit
    _

</llo_original>
